<compile_context>
chip_gen: v7x
topology: tpu7x:2x2x1
jax: 0.10.0
libtpu: 0.0.40
codegen_flags: <defaults>
</compile_context>

<pallas_src>
import jax
import jax.numpy as jnp
from jax.experimental import pallas as pl
from jax.experimental.pallas import tpu as pltpu


def _round_up(x: int, m: int) -> int:
    return ((x + m - 1) // m) * m


def _round_down(x: int, m: int) -> int:
    return (x // m) * m


def _sublane_packing(dtype) -> int:
    # Rows per packed 32-bit sublane word: f32 -> 8, bf16 -> 16, int8/u8 -> 32.
    return max(8, 32 // jnp.dtype(dtype).itemsize)


def _normalize_kernel(ss_ref, x_ref, o_ref):
    # ss_ref: (block_r, 2) f32, col 0 = scale (1/std), col 1 = shift (-mean/std)
    # x_ref/o_ref: (block_r, block_c) lane-dense tile of the flattened image.
    x = x_ref[...].astype(jnp.float32)
    scale = ss_ref[:, 0:1]
    shift = ss_ref[:, 1:2]
    o_ref[...] = (x * scale + shift).astype(o_ref.dtype)


def normalization(img: jax.Array, mean, std, *,
                  target_block_bytes: int = 4 << 20) -> jax.Array:
    """(img - mean[None,:,None,None]) / std[None,:,None,None] for NCHW img."""
    mean = jnp.asarray(mean)
    std = jnp.asarray(std)
    N, C, H, W = img.shape
    assert mean.shape == (C,) and std.shape == (C,)

    # Match PyTorch promotion: integer images normalize to float.
    out_dtype = jnp.result_type(img.dtype, mean.dtype, std.dtype)
    if not jnp.issubdtype(out_dtype, jnp.floating):
        out_dtype = jnp.float32

    R, L = N * C, H * W
    Lp = _round_up(L, 128)          # lane-dense width (pad if needed)

    x2 = img.reshape(R, L)
    if Lp != L:
        x2 = jnp.pad(x2, ((0, 0), (0, Lp - L)))

    # (x - mean)/std == x * (1/std) + (-mean/std); per-(n,c)-row constants,
    # packed into a single (R, 2) array. (Fused form differs by ~1 ulp from
    # (x-mean)/std; tolerances below are relaxed accordingly.)
    inv_std = 1.0 / std.astype(jnp.float32)
    scale = jnp.tile(inv_std, N)                               # (R,)
    shift = jnp.tile(-mean.astype(jnp.float32) * inv_std, N)   # (R,)
    scale_shift = jnp.stack([scale, shift], axis=1)            # (R, 2) f32

    in_bytes = jnp.dtype(img.dtype).itemsize
    out_bytes = jnp.dtype(out_dtype).itemsize
    elem_bytes = max(in_bytes, out_bytes)
    sub_mult = max(_sublane_packing(img.dtype), _sublane_packing(out_dtype))

    # ---- Tile selection (Lp is always a multiple of 128) ----
    if Lp * sub_mult * elem_bytes > target_block_bytes:
        block_c = max(128, _round_down(target_block_bytes // (sub_mult * elem_bytes), 128))
        block_c = min(block_c, Lp)
    else:
        block_c = Lp

    rows_budget = max(1, target_block_bytes // (block_c * elem_bytes))
    block_r = min(R, max(sub_mult, _round_down(rows_budget, sub_mult)))
    # Cap so the lane-padded (block_r, 2)->(block_r, 128) scale/shift VMEM
    # buffers stay small even for pathological (huge N*C, tiny H*W) shapes.
    block_r = min(block_r, max(sub_mult, 4096))

    # Guarantee >=2 grid steps for any non-trivial problem so both v7x
    # TensorCores get work under dimension_semantics="parallel".
    total_bytes = R * Lp * elem_bytes
    if pl.cdiv(R, block_r) * pl.cdiv(Lp, block_c) == 1 and total_bytes > (1 << 20):
        if R >= 2 * sub_mult:
            block_r = min(R, _round_up(pl.cdiv(R, 2), sub_mult))
        elif Lp >= 256:
            block_c = _round_up(pl.cdiv(Lp, 2), 128)

    grid = (pl.cdiv(R, block_r), pl.cdiv(Lp, block_c))

    x_spec = pl.BlockSpec((block_r, block_c), lambda i, j: (i, j))
    ss_spec = pl.BlockSpec((block_r, 2), lambda i, j: (i, 0))

    out2 = pl.pallas_call(
        _normalize_kernel,
        out_shape=jax.ShapeDtypeStruct((R, Lp), out_dtype),
        grid=grid,
        in_specs=[ss_spec, x_spec],
        out_specs=x_spec,
        compiler_params=pltpu.CompilerParams(
            dimension_semantics=("parallel", "parallel"),
            # Explicit limit: safe on v6e/v7x (32 MiB scoped default) and lifts
            # v5e's 16 MiB default so the 4 MiB double-buffered tiles fit.
            vmem_limit_bytes=32 << 20,
        ),
    )(scale_shift, x2)

    if Lp != L:
        out2 = out2[:, :L]
    return out2.reshape(N, C, H, W)


if __name__ == "__main__":
    key = jax.random.PRNGKey(0)
    k1, k2 = jax.random.split(key, 2)

    # Case 1: lane-aligned f32 image (H*W = 256, multiple of 128).
    N, C, H, W = 2, 4, 16, 16
    img = jax.random.uniform(k1, (N, C, H, W), dtype=jnp.float32)
    mean = jnp.array([0.485, 0.456, 0.406, 0.500], dtype=jnp.float32)
    std = jnp.array([0.229, 0.224, 0.225, 0.250], dtype=jnp.float32)

    out = jax.block_until_ready(normalization(img, mean, std))
    ref = (img - mean[None, :, None, None]) / std[None, :, None, None]
    assert out.shape == img.shape and out.dtype == jnp.float32
    assert jnp.allclose(out, ref, atol=1e-5, rtol=1e-5)

    # Case 2: unaligned spatial dims (7x7 -> lane-padding path).
    N2, C2, H2, W2 = 2, 3, 7, 7
    img2 = jax.random.uniform(k2, (N2, C2, H2, W2), dtype=jnp.float32)
    mean2 = jnp.array([0.485, 0.456, 0.406], dtype=jnp.float32)
    std2 = jnp.array([0.229, 0.224, 0.225], dtype=jnp.float32)

    out2 = jax.block_until_ready(normalization(img2, mean2, std2))
    ref2 = (img2 - mean2[None, :, None, None]) / std2[None, :, None, None]
    assert out2.shape == img2.shape and out2.dtype == jnp.float32
    assert jnp.allclose(out2, ref2, atol=1e-5, rtol=1e-5)

    print("KERNEL_OK")
</pallas_src>

<mosaic_0001>
module attributes {stable_mosaic.version = 11 : i64} {
  func.func @_normalize_kernel(%arg0: i32, %arg1: i32, %arg2: memref<8x2xf32, #tpu.memory_space<vmem>>, %arg3: memref<8x256xf32, #tpu.memory_space<vmem>>, %arg4: memref<8x256xf32, #tpu.memory_space<vmem>>) attributes {dimension_semantics = [#tpu.dimension_semantics<parallel>, #tpu.dimension_semantics<parallel>], iteration_bounds = array<i64: 1, 1>, scalar_prefetch = 0 : i64, scratch_operands = 0 : i64, tpu.core_type = #tpu.core_type<tc>, window_params = [{transform_indices = @transform_0, window_bounds = array<i64: 8, 2>}, {transform_indices = @transform_1, window_bounds = array<i64: 8, 256>}, {transform_indices = @transform_2, window_bounds = array<i64: 8, 256>}]} {
    %c0 = arith.constant 0 : index
    %c0_0 = arith.constant 0 : index
    %0 = vector.load %arg3[%c0, %c0_0] : memref<8x256xf32, #tpu.memory_space<vmem>>, vector<8x256xf32>
    %c0_1 = arith.constant 0 : index
    %c0_2 = arith.constant 0 : index
    %1 = vector.load %arg2[%c0_1, %c0_2] : memref<8x2xf32, #tpu.memory_space<vmem>>, vector<8x1xf32>
    %c0_3 = arith.constant 0 : index
    %c1 = arith.constant 1 : index
    %2 = vector.load %arg2[%c0_3, %c1] : memref<8x2xf32, #tpu.memory_space<vmem>>, vector<8x1xf32>
    %3 = vector.broadcast %1 : vector<8x1xf32> to vector<8x256xf32>
    %4 = arith.mulf %0, %3 : vector<8x256xf32>
    %5 = vector.broadcast %2 : vector<8x1xf32> to vector<8x256xf32>
    %6 = arith.addf %4, %5 : vector<8x256xf32>
    %c0_4 = arith.constant 0 : index
    %c0_5 = arith.constant 0 : index
    %7 = vector.load %arg4[%c0_4, %c0_5] : memref<8x256xf32, #tpu.memory_space<vmem>>, vector<8x256xf32>
    tpu.vector_store %arg4[%c0_4, %c0_5], %6 {strides = array<i32>} : memref<8x256xf32, #tpu.memory_space<vmem>>, vector<8x256xf32>,
    return
  }
  func.func @transform_0(%arg0: i32, %arg1: i32) -> (i32, i32) {
    %c0_i32 = arith.constant 0 : i32
    %c0_i32_0 = arith.constant 0 : i32
    return %arg0, %c0_i32 : i32, i32
  }
  func.func @transform_1(%arg0: i32, %arg1: i32) -> (i32, i32) {
    %c0_i32 = arith.constant 0 : i32
    return %arg0, %arg1 : i32, i32
  }
  func.func @transform_2(%arg0: i32, %arg1: i32) -> (i32, i32) {
    %c0_i32 = arith.constant 0 : i32
    return %arg0, %arg1 : i32, i32
  }
}

</mosaic_0001>

<llo_original>
// kernel: tpu_custom_call.1
$region0: #{tpu_custom_call.1}
  #allocation0 [shape = 'u32[]', space=smem, size = 0x4, offset = 0x4, fixed_abs, tag = 'smem constant byte address 0x4 - core index']
  #allocation1 [shape = 'u32[144,128]{1,0:T(1,128)}', space=vmem, size = 0x12000, scoped, tag = 'internal scratch']
  %s0 = inlined_call_operand.vmem [shape: f32[8,2], index: 0, kind: input, shape index: {}]
  %s1 = inlined_call_operand.hbm [shape: f32[8,256], index: 1, kind: input, shape index: {}]
  %s2 = inlined_call_operand.hbm [shape: f32[8,256], index: 2, kind: output, shape index: {}]
  %s3 = sld [smem:[#allocation0]]
  $region22: #{tpu_custom_call.1} parent=0
    _
  %s5 = ssub.s32 1, %s3
  %s6 = scalar_select 0, %s5, %s3
  $region1: #{tpu_custom_call.1} parent=0
    #allocation2 [shape = 'u8[8192]{0}', space=vmem, size = 0x2000, scoped, tag = 'input window, operand 1, single buffered']
    #allocation3 [shape = 's32[1]{0}', space=sflag, size = 0x4, scoped, tag = 'scoped memory for tpu_custom_call.1']
    #allocation4 [shape = 's32[1]{0}', space=sflag, size = 0x4, scoped, tag = 'scoped memory for tpu_custom_call.1']
    #allocation5 [shape = 'u8[8192]{0}', space=vmem, size = 0x2000, scoped, tag = 'output window, operand 0, single buffered']
    %7 = vsyncpa [#allocation3], 0
    %8 = vsyncpa [#allocation4], 0
    // Predicated region
    $region2: #{tpu_custom_call.1} parent=1 // pred_check
      _
    $region3: #{tpu_custom_call.1} parent=1 // pred_check_branch
      %10 = sbr.rel (0) target = $region5
    $region4: #{tpu_custom_call.1} parent=1 // pred_region
      _
    $region5: #{tpu_custom_call.1} parent=1 // pred_fallthru
      _
    // Predicated region
    $region6: #{tpu_custom_call.1} parent=1 // pred_check
      _
    $region7: #{tpu_custom_call.1} parent=1 // pred_check_branch
      %12 = sbr.rel (0) target = $region9
    $region8: #{tpu_custom_call.1} parent=1 // pred_region
      %s14 = ssub.s32 256, 256
      %15 = vsyncadd [#allocation3], %s14
      %s17 = sshll.u32 [#allocation2], 4
      %s18 = int_to_ptr.vmem [resolvable:$true] %s17
      %20 = dma.hbm_to_vmem [thread:$0]  %s1, 256, %s18, [#allocation3]
    $region9: #{tpu_custom_call.1} parent=1 // pred_fallthru
      _
    // Predicated region
    $region10: #{tpu_custom_call.1} parent=1 // pred_check
      _
    $region11: #{tpu_custom_call.1} parent=1 // pred_check_branch
      %22 = sbr.rel (0) target = $region13
    $region12: #{tpu_custom_call.1} parent=1 // pred_region
      %23 = dma.done [#allocation3], 256
    $region13: #{tpu_custom_call.1} parent=1 // pred_fallthru
      _
    %v24 = vld [vmem:[#allocation2] sm:$0xff]
    %v25 = vld [vmem:[#allocation2 + $0x8] sm:$0xff]
    %v26 = vld [vmem:[%s0] sm:$0xff]
    %28 = vset.pattern.permute.xlu0 0
    %29 = vperm.xlu0 %28, %v26
    %v30 = vpop.permute.xlu0 %29
    %v32 = vmul.f32 %v24, %v30
    %v33 = vmul.f32 %v25, %v30
    %34 = vset.pattern.permute.xlu0 1
    %35 = vperm.xlu0 %34, %v26
    %v36 = vpop.permute.xlu0 %35
    %v38 = vadd.f32 %v32, %v36
    %v39 = vadd.f32 %v33, %v36
    %40 = vst [vmem:[#allocation5] sm:$0xff] %v38
    %41 = vst [vmem:[#allocation5 + $0x8] sm:$0xff] %v39
    // Predicated region
    $region14: #{tpu_custom_call.1} parent=1 // pred_check
      _
    $region15: #{tpu_custom_call.1} parent=1 // pred_check_branch
      %43 = sbr.rel (0) target = $region17
    $region16: #{tpu_custom_call.1} parent=1 // pred_region
      %s45 = ssub.s32 256, 256
      %46 = vsyncadd [#allocation4], %s45
      %s48 = sshll.u32 [#allocation5], 4
      %s49 = int_to_ptr.vmem [resolvable:$true] %s48
      %51 = dma.vmem_to_hbm [thread:$0]  %s49, 256, %s2, [#allocation4]
    $region17: #{tpu_custom_call.1} parent=1 // pred_fallthru
      _
    // Predicated region
    $region18: #{tpu_custom_call.1} parent=1 // pred_check
      _
    $region19: #{tpu_custom_call.1} parent=1 // pred_check_branch
      %53 = sbr.rel (0) target = $region21
    $region20: #{tpu_custom_call.1} parent=1 // pred_region
      %54 = dma.done [#allocation4], 256
    $region21: #{tpu_custom_call.1} parent=1 // pred_fallthru
      _
    %55 = vsyncpa [#allocation3], 1
    %56 = vsyncpa [#allocation4], 1

</llo_original>
